<compile_context>
chip_gen: v7x
topology: tpu7x:2x2x1
jax: 0.10.0
libtpu: 0.0.40
codegen_flags: <defaults>
</compile_context>

<pallas_src>
import functools

import jax
import jax.numpy as jnp
from jax.experimental import pallas as pl
from jax.experimental.pallas import tpu as pltpu

LANES = 128


def _fused_kernel(x_ref, o_ref, acc_min, acc_max, sc_ref, *,
                  qmax, n_valid, block_rows, lanes):
    p = pl.program_id(0)          # 0 = min/max pass, 1 = quantize pass
    i = pl.program_id(1)          # tile index
    n_tiles = pl.num_programs(1)

    @pl.when(p == 0)
    def _phase0():
        x = x_ref[...].astype(jnp.float32)

        @pl.when(i == 0)
        def _init():
            acc_min[...] = jnp.full((8, lanes), jnp.inf, jnp.float32)
            acc_max[...] = jnp.full((8, lanes), -jnp.inf, jnp.float32)

        def _fold(vmin, vmax):
            # Fold a (block_rows, lanes) tile into the (8, lanes) accumulators.
            if block_rows % 8 == 0:
                # (R,128) -> (R/8, 8, 128): one vreg per leading index, so the
                # axis-0 reduce is plain elementwise VPU mins of R/8 vregs.
                pmin = jnp.min(vmin.reshape(-1, 8, lanes), axis=0)
                pmax = jnp.max(vmax.reshape(-1, 8, lanes), axis=0)
            else:  # only possible on the (small) VMEM-resident path
                pmin = jnp.min(vmin, axis=0, keepdims=True)
                pmax = jnp.max(vmax, axis=0, keepdims=True)
            acc_min[...] = jnp.minimum(acc_min[...], pmin)
            acc_max[...] = jnp.maximum(acc_max[...], pmax)

        @pl.when(i < n_tiles - 1)
        def _interior():
            _fold(x, x)          # no masking cost on interior tiles

        @pl.when(i == n_tiles - 1)
        def _last_and_finalize():
            # Mask padded / out-of-bounds tail elements with min/max-neutral fills.
            # (int32 global index: fine for n < 2**31 elements.)
            row = jax.lax.broadcasted_iota(jnp.int32, x.shape, 0)
            lane = jax.lax.broadcasted_iota(jnp.int32, x.shape, 1)
            idx = (i * block_rows + row) * lanes + lane
            valid = idx < n_valid
            _fold(jnp.where(valid, x, jnp.inf), jnp.where(valid, x, -jnp.inf))

            # Single small cross-lane reduction for the whole tensor.
            x_min = jnp.min(acc_min[...])
            x_max = jnp.max(acc_max[...])
            rng = x_max - x_min
            nz = rng != 0.0
            sc_ref[0] = x_min
            sc_ref[1] = jnp.where(nz, rng / qmax, jnp.float32(1.0))   # scale
            sc_ref[2] = jnp.where(nz, qmax / rng, jnp.float32(1.0))   # 1/scale

    @pl.when(p == 1)
    def _phase1():
        x_min = sc_ref[0]
        scale = sc_ref[1]
        inv_scale = sc_ref[2]
        x = x_ref[...].astype(jnp.float32)
        # Multiply by the precomputed inverse instead of dividing per element (an
        # f32 divide is far more expensive on the VPU/EUP; result can differ from
        # the torch divide by at most one quantization level on exact-.5 ties).
        x_int = jnp.clip(jnp.round((x - x_min) * inv_scale), 0.0, qmax)
        o_ref[...] = (x_int * scale + x_min).astype(o_ref.dtype)


def _vmem_capacity_bytes():
    try:
        info = pltpu.get_tpu_info()
        cap = getattr(info, "vmem_capacity_bytes", None)
        if cap:
            return int(cap)
    except Exception:
        pass
    return 64 * 2**20     # conservative (v7x-sized) fallback


def quantization_simulator(x, bits: int = 8):
    if bits >= 32:
        return x
    n = int(x.size)
    if n == 0:            # guard: min/max undefined on empty input
        return x

    qmax = float(2 ** bits - 1)
    orig_shape = x.shape
    dtype = x.dtype
    itemsize = jnp.dtype(dtype).itemsize

    flat = x.reshape(-1)
    lanes = LANES

    pad = (-n) % lanes
    if pad:
        # Only element counts not divisible by 128 pay this copy (+ the slice
        # below); the fill value is irrelevant because phase 0 masks by true count.
        # TODO(synk): a fully pad-free ragged path needs a separate <128-elem tail.
        flat = jnp.pad(flat, (0, pad))
    padded_n = n + pad
    rows = padded_n // lanes
    x2d = flat.reshape(rows, lanes)

    sub = {4: 8, 2: 16, 1: 32}.get(itemsize, 8)   # sublane packing per dtype
    vmem_cap = _vmem_capacity_bytes()
    tensor_bytes = padded_n * itemsize

    # VMEM-resident path: whole tensor as one block (full-dim block is exempt from
    # the sublane-multiple rule). Input block index is constant across both phases,
    # so the phase-1 read comes from VMEM, not HBM (2n bytes instead of 3n).
    resident = tensor_bytes <= vmem_cap // 8
    if resident:
        block_rows = rows
    else:
        target_block_bytes = 2 * 2**20                   # ~2 MiB DMA chunks
        block_rows = max(sub, (target_block_bytes // (lanes * itemsize)) // sub * sub)
        block_rows = min(block_rows, ((rows + sub - 1) // sub) * sub)
    n_tiles = pl.cdiv(rows, block_rows)

    block_bytes = block_rows * lanes * itemsize
    need = 4 * block_bytes + 64 * 1024                   # 2x in + 2x out + accs
    vmem_limit = int(min(vmem_cap * 7 // 8, max(32 * 2**20, need + 4 * 2**20)))

    cost = pl.CostEstimate(
        flops=8 * n, transcendentals=0,
        bytes_accessed=(2 if resident else 3) * n * itemsize)

    out2d = pl.pallas_call(
        functools.partial(_fused_kernel, qmax=qmax, n_valid=n,
                          block_rows=block_rows, lanes=lanes),
        out_shape=jax.ShapeDtypeStruct((rows, lanes), dtype),
        grid=(2, n_tiles),
        in_specs=[pl.BlockSpec((block_rows, lanes), lambda p, i: (i, 0))],
        # Phase 0 parks the output window on block 0 (never written there);
        # phase 1 walks the real output blocks. See NOTE at top of file.
        out_specs=pl.BlockSpec((block_rows, lanes), lambda p, i: (i * p, 0)),
        scratch_shapes=[
            pltpu.VMEM((8, lanes), jnp.float32),         # running elementwise min
            pltpu.VMEM((8, lanes), jnp.float32),         # running elementwise max
            pltpu.SMEM((3,), jnp.float32),               # x_min, scale, 1/scale
        ],
        compiler_params=pltpu.CompilerParams(
            dimension_semantics=("arbitrary", "arbitrary"),
            vmem_limit_bytes=vmem_limit),
        cost_estimate=cost,
    )(x2d)

    out = out2d.reshape(-1)
    if pad:
        out = out[:n]
    return out.reshape(orig_shape)


def _reference(x, bits=8):
    """Pure-JAX reference mirroring the PyTorch forward (same multiply-by-inverse
    formulation as the kernel)."""
    if bits >= 32:
        return x
    qmax = float(2 ** bits - 1)
    x32 = x.astype(jnp.float32)
    x_min = jnp.min(x32)
    x_max = jnp.max(x32)
    rng = x_max - x_min
    nz = rng != 0.0
    scale = jnp.where(nz, rng / qmax, jnp.float32(1.0))
    inv_scale = jnp.where(nz, qmax / rng, jnp.float32(1.0))
    x_int = jnp.clip(jnp.round((x32 - x_min) * inv_scale), 0.0, qmax)
    return (x_int * scale + x_min).astype(x.dtype)


if __name__ == "__main__":
    key = jax.random.PRNGKey(0)
    k1, k2, k3, k4 = jax.random.split(key, 4)

    # Primary: small NCHW activation, matching the module's usage (resident path).
    x = jax.random.normal(k1, (2, 4, 16, 16), dtype=jnp.float32)
    out = jax.block_until_ready(quantization_simulator(x, bits=8))
    ref = jax.block_until_ready(_reference(x, bits=8))
    assert out.shape == x.shape and out.dtype == x.dtype
    assert jnp.allclose(out, ref, atol=1e-5, rtol=1e-5), "mismatch (primary)"

    # Ragged element count (not a multiple of 128) -> pad path + keepdims fold.
    x2 = jax.random.normal(k2, (3, 5, 17, 13), dtype=jnp.float32)
    out2 = jax.block_until_ready(quantization_simulator(x2, bits=4))
    ref2 = jax.block_until_ready(_reference(x2, bits=4))
    assert jnp.allclose(out2, ref2, atol=1e-5, rtol=1e-5), "mismatch (ragged)"

    # bf16 input exercises the dtype-aware path (in-register f32 upcast, bf16 out).
    x3 = jax.random.normal(k3, (2, 8, 32, 32), dtype=jnp.bfloat16)
    out3 = jax.block_until_ready(quantization_simulator(x3, bits=8))
    ref3 = jax.block_until_ready(_reference(x3, bits=8))
    assert out3.dtype == jnp.bfloat16
    assert jnp.allclose(out3.astype(jnp.float32), ref3.astype(jnp.float32),
                        atol=2e-2, rtol=2e-2), "mismatch (bf16)"

    # Large tensor (32 MiB) -> streaming multi-tile path on every generation.
    x4 = jax.random.normal(k4, (2048, 4096), dtype=jnp.float32)
    out4 = jax.block_until_ready(quantization_simulator(x4, bits=8))
    ref4 = jax.block_until_ready(_reference(x4, bits=8))
    assert jnp.allclose(out4, ref4, atol=1e-5, rtol=1e-5), "mismatch (streaming)"

    # bits >= 32 passthrough.
    assert jnp.array_equal(quantization_simulator(x, bits=32), x)

    # TODO(synk): straight-through gradient (x + (x_q - x).detach()) is a backward-pass
    # concern only; this kernel implements the forward value x_q, matching the module.
    print("KERNEL_OK")
</pallas_src>

<mosaic_0001>
module attributes {stable_mosaic.version = 11 : i64} {
  func.func @_fused_kernel(%arg0: i32, %arg1: i32, %arg2: memref<16x128xf32, #tpu.memory_space<vmem>>, %arg3: memref<16x128xf32, #tpu.memory_space<vmem>>, %arg4: memref<8x128xf32, #tpu.memory_space<vmem>>, %arg5: memref<8x128xf32, #tpu.memory_space<vmem>>, %arg6: memref<3xf32, #tpu.memory_space<smem>>) attributes {dimension_semantics = [#tpu.dimension_semantics<arbitrary>, #tpu.dimension_semantics<arbitrary>], iteration_bounds = array<i64: 2, 1>, scalar_prefetch = 0 : i64, scratch_operands = 3 : i64, tpu.core_type = #tpu.core_type<tc>, window_params = [{transform_indices = @transform_0, window_bounds = array<i64: 16, 128>}, {transform_indices = @transform_1, window_bounds = array<i64: 16, 128>}]} {
    %c0_i32 = arith.constant 0 : i32
    %0 = arith.cmpi eq, %arg0, %c0_i32 : i32
    %1 = arith.extui %0 : i1 to i32
    %c0_i32_0 = arith.constant 0 : i32
    %2 = arith.cmpi ne, %1, %c0_i32_0 : i32
    scf.if %2 {
      %c0 = arith.constant 0 : index
      %c0_2 = arith.constant 0 : index
      %6 = vector.load %arg2[%c0, %c0_2] : memref<16x128xf32, #tpu.memory_space<vmem>>, vector<16x128xf32>
      %c0_i32_3 = arith.constant 0 : i32
      %7 = arith.cmpi eq, %arg1, %c0_i32_3 : i32
      %8 = arith.extui %7 : i1 to i32
      %c0_i32_4 = arith.constant 0 : i32
      %9 = arith.cmpi ne, %8, %c0_i32_4 : i32
      scf.if %9 {
        %cst = arith.constant 0x7F800000 : f32
        %16 = vector.broadcast %cst : f32 to vector<8x128xf32>
        %c0_9 = arith.constant 0 : index
        %c0_10 = arith.constant 0 : index
        %17 = vector.load %arg4[%c0_9, %c0_10] : memref<8x128xf32, #tpu.memory_space<vmem>>, vector<8x128xf32>
        tpu.vector_store %arg4[%c0_9, %c0_10], %16 {strides = array<i32>} : memref<8x128xf32, #tpu.memory_space<vmem>>, vector<8x128xf32>,
        %cst_11 = arith.constant 0xFF800000 : f32
        %18 = vector.broadcast %cst_11 : f32 to vector<8x128xf32>
        %c0_12 = arith.constant 0 : index
        %c0_13 = arith.constant 0 : index
        %19 = vector.load %arg5[%c0_12, %c0_13] : memref<8x128xf32, #tpu.memory_space<vmem>>, vector<8x128xf32>
        tpu.vector_store %arg5[%c0_12, %c0_13], %18 {strides = array<i32>} : memref<8x128xf32, #tpu.memory_space<vmem>>, vector<8x128xf32>,
      } else {
      }
      %c0_i32_5 = arith.constant 0 : i32
      %10 = arith.cmpi slt, %arg1, %c0_i32_5 : i32
      %11 = arith.extui %10 : i1 to i32
      %c0_i32_6 = arith.constant 0 : i32
      %12 = arith.cmpi ne, %11, %c0_i32_6 : i32
      scf.if %12 {
        %16 = vector.shape_cast %6 : vector<16x128xf32> to vector<2x8x128xf32>
        %cst = arith.constant dense<0x7F800000> : vector<8x128xf32>
        %17 = vector.multi_reduction <minimumf>, %16, %cst [0] : vector<2x8x128xf32> to vector<8x128xf32>
        %18 = vector.shape_cast %6 : vector<16x128xf32> to vector<2x8x128xf32>
        %cst_9 = arith.constant dense<0xFF800000> : vector<8x128xf32>
        %19 = vector.multi_reduction <maximumf>, %18, %cst_9 [0] : vector<2x8x128xf32> to vector<8x128xf32>
        %c0_10 = arith.constant 0 : index
        %c0_11 = arith.constant 0 : index
        %20 = vector.load %arg4[%c0_10, %c0_11] : memref<8x128xf32, #tpu.memory_space<vmem>>, vector<8x128xf32>
        %21 = arith.minimumf %20, %17 : vector<8x128xf32>
        %c0_12 = arith.constant 0 : index
        %c0_13 = arith.constant 0 : index
        %22 = vector.load %arg4[%c0_12, %c0_13] : memref<8x128xf32, #tpu.memory_space<vmem>>, vector<8x128xf32>
        tpu.vector_store %arg4[%c0_12, %c0_13], %21 {strides = array<i32>} : memref<8x128xf32, #tpu.memory_space<vmem>>, vector<8x128xf32>,
        %c0_14 = arith.constant 0 : index
        %c0_15 = arith.constant 0 : index
        %23 = vector.load %arg5[%c0_14, %c0_15] : memref<8x128xf32, #tpu.memory_space<vmem>>, vector<8x128xf32>
        %24 = arith.maximumf %23, %19 : vector<8x128xf32>
        %c0_16 = arith.constant 0 : index
        %c0_17 = arith.constant 0 : index
        %25 = vector.load %arg5[%c0_16, %c0_17] : memref<8x128xf32, #tpu.memory_space<vmem>>, vector<8x128xf32>
        tpu.vector_store %arg5[%c0_16, %c0_17], %24 {strides = array<i32>} : memref<8x128xf32, #tpu.memory_space<vmem>>, vector<8x128xf32>,
      } else {
      }
      %c0_i32_7 = arith.constant 0 : i32
      %13 = arith.cmpi eq, %arg1, %c0_i32_7 : i32
      %14 = arith.extui %13 : i1 to i32
      %c0_i32_8 = arith.constant 0 : i32
      %15 = arith.cmpi ne, %14, %c0_i32_8 : i32
      scf.if %15 {
        %16 = tpu.iota {dimensions = array<i32: 0>} : vector<16x128xi32>
        %17 = tpu.iota {dimensions = array<i32: 1>} : vector<16x128xi32>
        %c16_i32 = arith.constant 16 : i32
        %18 = arith.muli %arg1, %c16_i32 : i32
        %19 = vector.broadcast %18 : i32 to vector<16x128xi32>
        %20 = arith.addi %19, %16 : vector<16x128xi32>
        %c128_i32 = arith.constant 128 : i32
        %21 = vector.broadcast %c128_i32 : i32 to vector<16x128xi32>
        %22 = arith.muli %20, %21 : vector<16x128xi32>
        %23 = arith.addi %22, %17 : vector<16x128xi32>
        %c2048_i32 = arith.constant 2048 : i32
        %24 = vector.broadcast %c2048_i32 : i32 to vector<16x128xi32>
        %25 = arith.cmpi slt, %23, %24 : vector<16x128xi32>
        %cst = arith.constant 0x7F800000 : f32
        %26 = vector.broadcast %cst : f32 to vector<16x128xf32>
        %27 = arith.select %25, %6, %26 : vector<16x128xi1>, vector<16x128xf32>
        %cst_9 = arith.constant 0xFF800000 : f32
        %28 = vector.broadcast %cst_9 : f32 to vector<16x128xf32>
        %29 = arith.select %25, %6, %28 : vector<16x128xi1>, vector<16x128xf32>
        %30 = vector.shape_cast %27 : vector<16x128xf32> to vector<2x8x128xf32>
        %cst_10 = arith.constant dense<0x7F800000> : vector<8x128xf32>
        %31 = vector.multi_reduction <minimumf>, %30, %cst_10 [0] : vector<2x8x128xf32> to vector<8x128xf32>
        %32 = vector.shape_cast %29 : vector<16x128xf32> to vector<2x8x128xf32>
        %cst_11 = arith.constant dense<0xFF800000> : vector<8x128xf32>
        %33 = vector.multi_reduction <maximumf>, %32, %cst_11 [0] : vector<2x8x128xf32> to vector<8x128xf32>
        %c0_12 = arith.constant 0 : index
        %c0_13 = arith.constant 0 : index
        %34 = vector.load %arg4[%c0_12, %c0_13] : memref<8x128xf32, #tpu.memory_space<vmem>>, vector<8x128xf32>
        %35 = arith.minimumf %34, %31 : vector<8x128xf32>
        %c0_14 = arith.constant 0 : index
        %c0_15 = arith.constant 0 : index
        %36 = vector.load %arg4[%c0_14, %c0_15] : memref<8x128xf32, #tpu.memory_space<vmem>>, vector<8x128xf32>
        tpu.vector_store %arg4[%c0_14, %c0_15], %35 {strides = array<i32>} : memref<8x128xf32, #tpu.memory_space<vmem>>, vector<8x128xf32>,
        %c0_16 = arith.constant 0 : index
        %c0_17 = arith.constant 0 : index
        %37 = vector.load %arg5[%c0_16, %c0_17] : memref<8x128xf32, #tpu.memory_space<vmem>>, vector<8x128xf32>
        %38 = arith.maximumf %37, %33 : vector<8x128xf32>
        %c0_18 = arith.constant 0 : index
        %c0_19 = arith.constant 0 : index
        %39 = vector.load %arg5[%c0_18, %c0_19] : memref<8x128xf32, #tpu.memory_space<vmem>>, vector<8x128xf32>
        tpu.vector_store %arg5[%c0_18, %c0_19], %38 {strides = array<i32>} : memref<8x128xf32, #tpu.memory_space<vmem>>, vector<8x128xf32>,
        %c0_20 = arith.constant 0 : index
        %c0_21 = arith.constant 0 : index
        %40 = vector.load %arg4[%c0_20, %c0_21] : memref<8x128xf32, #tpu.memory_space<vmem>>, vector<8x128xf32>
        %41 = vector.shape_cast %40 : vector<8x128xf32> to vector<1x8x128xf32>
        %cst_22 = arith.constant dense<0x7F800000> : vector<1xf32>
        %42 = vector.multi_reduction <minimumf>, %41, %cst_22 [1, 2] : vector<1x8x128xf32> to vector<1xf32>
        %43 = vector.shape_cast %42 : vector<1xf32> to vector<1x1x1xf32>
        %44 = vector.extract %43[0, 0, 0] : f32 from vector<1x1x1xf32>
        %c0_23 = arith.constant 0 : index
        %c0_24 = arith.constant 0 : index
        %45 = vector.load %arg5[%c0_23, %c0_24] : memref<8x128xf32, #tpu.memory_space<vmem>>, vector<8x128xf32>
        %46 = vector.shape_cast %45 : vector<8x128xf32> to vector<1x8x128xf32>
        %cst_25 = arith.constant dense<0xFF800000> : vector<1xf32>
        %47 = vector.multi_reduction <maximumf>, %46, %cst_25 [1, 2] : vector<1x8x128xf32> to vector<1xf32>
        %48 = vector.shape_cast %47 : vector<1xf32> to vector<1x1x1xf32>
        %49 = vector.extract %48[0, 0, 0] : f32 from vector<1x1x1xf32>
        %50 = arith.subf %49, %44 : f32
        %cst_26 = arith.constant 0.000000e+00 : f32
        %51 = arith.cmpf one, %50, %cst_26 : f32
        %c0_27 = arith.constant 0 : index
        %52 = memref.load %arg6[%c0_27] : memref<3xf32, #tpu.memory_space<smem>>
        memref.store %44, %arg6[%c0_27] : memref<3xf32, #tpu.memory_space<smem>>
        %cst_28 = arith.constant 2.550000e+02 : f32
        %53 = arith.divf %50, %cst_28 : f32
        %cst_29 = arith.constant 1.000000e+00 : f32
        %54 = arith.select %51, %53, %cst_29 : f32
        %c1 = arith.constant 1 : index
        %55 = memref.load %arg6[%c1] : memref<3xf32, #tpu.memory_space<smem>>
        memref.store %54, %arg6[%c1] : memref<3xf32, #tpu.memory_space<smem>>
        %cst_30 = arith.constant 2.550000e+02 : f32
        %56 = arith.divf %cst_30, %50 : f32
        %cst_31 = arith.constant 1.000000e+00 : f32
        %57 = arith.select %51, %56, %cst_31 : f32
        %c2 = arith.constant 2 : index
        %58 = memref.load %arg6[%c2] : memref<3xf32, #tpu.memory_space<smem>>
        memref.store %57, %arg6[%c2] : memref<3xf32, #tpu.memory_space<smem>>
      } else {
      }
    } else {
    }
    %c1_i32 = arith.constant 1 : i32
    %3 = arith.cmpi eq, %arg0, %c1_i32 : i32
    %4 = arith.extui %3 : i1 to i32
    %c0_i32_1 = arith.constant 0 : i32
    %5 = arith.cmpi ne, %4, %c0_i32_1 : i32
    scf.if %5 {
      %c0 = arith.constant 0 : index
      %6 = memref.load %arg6[%c0] : memref<3xf32, #tpu.memory_space<smem>>
      %c1 = arith.constant 1 : index
      %7 = memref.load %arg6[%c1] : memref<3xf32, #tpu.memory_space<smem>>
      %c2 = arith.constant 2 : index
      %8 = memref.load %arg6[%c2] : memref<3xf32, #tpu.memory_space<smem>>
      %c0_2 = arith.constant 0 : index
      %c0_3 = arith.constant 0 : index
      %9 = vector.load %arg2[%c0_2, %c0_3] : memref<16x128xf32, #tpu.memory_space<vmem>>, vector<16x128xf32>
      %10 = vector.broadcast %6 : f32 to vector<16x128xf32>
      %11 = arith.subf %9, %10 : vector<16x128xf32>
      %12 = vector.broadcast %8 : f32 to vector<16x128xf32>
      %13 = arith.mulf %11, %12 : vector<16x128xf32>
      %14 = math.roundeven %13 : vector<16x128xf32>
      %cst = arith.constant 0.000000e+00 : f32
      %cst_4 = arith.constant 2.550000e+02 : f32
      %15 = vector.broadcast %cst : f32 to vector<16x128xf32>
      %16 = arith.maximumf %15, %14 : vector<16x128xf32>
      %17 = vector.broadcast %cst_4 : f32 to vector<16x128xf32>
      %18 = arith.minimumf %17, %16 : vector<16x128xf32>
      %19 = vector.broadcast %7 : f32 to vector<16x128xf32>
      %20 = arith.mulf %18, %19 : vector<16x128xf32>
      %21 = vector.broadcast %6 : f32 to vector<16x128xf32>
      %22 = arith.addf %20, %21 : vector<16x128xf32>
      %c0_5 = arith.constant 0 : index
      %c0_6 = arith.constant 0 : index
      %23 = vector.load %arg3[%c0_5, %c0_6] : memref<16x128xf32, #tpu.memory_space<vmem>>, vector<16x128xf32>
      tpu.vector_store %arg3[%c0_5, %c0_6], %22 {strides = array<i32>} : memref<16x128xf32, #tpu.memory_space<vmem>>, vector<16x128xf32>,
    } else {
    }
    return
  }
  func.func @transform_0(%arg0: i32, %arg1: i32) -> (i32, i32) {
    %c0_i32 = arith.constant 0 : i32
    %c0_i32_0 = arith.constant 0 : i32
    return %arg1, %c0_i32 : i32, i32
  }
  func.func @transform_1(%arg0: i32, %arg1: i32) -> (i32, i32) {
    %0 = arith.muli %arg1, %arg0 : i32
    %c0_i32 = arith.constant 0 : i32
    %c0_i32_0 = arith.constant 0 : i32
    return %0, %c0_i32 : i32, i32
  }
}

</mosaic_0001>

<llo_original>
// kernel: tpu_custom_call.1
$region0: #{tpu_custom_call.1}
  #allocation0 [shape = 'u32[]', space=smem, size = 0x4, offset = 0x4, fixed_abs, tag = 'smem constant byte address 0x4 - core index']
  #allocation1 [shape = 'u32[144,128]{1,0:T(1,128)}', space=vmem, size = 0x12000, scoped, tag = 'internal scratch']
  #allocation2 [shape = 'f32[8,128]{1,0:T(8,128)}', space=vmem, size = 0x1000, scoped, tag = 'scratch operand']
  #allocation3 [shape = 'f32[8,128]{1,0:T(8,128)}', space=vmem, size = 0x1000, scoped, tag = 'scratch operand']
  #allocation4 [shape = 'f32[3]{0:T(128)}', space=smem, size = 0x200, scoped, tag = 'scratch operand']
  %s0 = inlined_call_operand.hbm [shape: f32[16,128], index: 0, kind: input, shape index: {}]
  %s1 = inlined_call_operand.hbm [shape: f32[16,128], index: 1, kind: output, shape index: {}]
  %s2 = sld [smem:[#allocation0]]
  $region61: #{tpu_custom_call.1} parent=0
    _
  %s4 = ssub.s32 1, %s2
  %s5 = scalar_select 0, %s4, %s2
  $region1: #{tpu_custom_call.1} parent=0
    #allocation5 [shape = 'u8[8192]{0}', space=vmem, size = 0x2000, scoped, tag = 'input window, operand 0, single buffered']
    #allocation6 [shape = 's32[2]{0}', space=sflag, size = 0x8, scoped, tag = 'scoped memory for tpu_custom_call.1']
    #allocation7 [shape = 's32[2]{0}', space=sflag, size = 0x8, scoped, tag = 'scoped memory for tpu_custom_call.1']
    #allocation8 [shape = 'u8[16384]{0}', space=vmem, size = 0x4000, scoped, tag = 'output window, operand 0']
    %6 = vsyncpa [#allocation6], 0
    %7 = vsyncpa [#allocation7], 0
    %s8 = scalar_lea.sflag [#allocation7], 1
    %9 = vsyncpa %s8, 0
    loop: start=0, step=1, limit=4
    $region2: #{tpu_custom_call.1} parent=1 // loop_pre_header
      _
    $region3: #{tpu_custom_call.1} parent=1 // loop_header
      %s11 = sphi 0, %s15
      %p12 = scmp.ge.s32.totalorder %s11, 4
      %s18 = sphi 0, %s30
      %s19 = sphi 0, %s26
      %s20 = sphi 0, %s18
      %s21 = sphi 0, %s19
      %s22 = sphi 0, %s20
      %s23 = sphi 0, %s21
      %s33 = sphi 0, %s35
      %s36 = sphi 0, %s33
      %s37 = sphi 0, %s36
      %s53 = sphi 0, %s37
      %s61 = sphi 0, %s63
      %s64 = sphi 0, %s61
      %s65 = sphi 0, %s64
      %s81 = sphi 0, %s65
    $region4: #{tpu_custom_call.1} parent=1 // loop_header_branch
      %14 = sbr.rel (%p12) target = $region8
    $region5: #{tpu_custom_call.1} parent=1 // loop_body
      %s16 = ssub.s32 %s11, 1
      %s17 = ssub.s32 %s11, 2
      %s24 = sadd.s32 1, %s19
      %p25 = scmp.ge.s32.totalorder %s24, 1
      %s26 = scalar_select %p25, 0, %s24
      %s27 = sadd.s32 1, %s18
      %s28 = scalar_select %p25, %s27, %s18
      %p29 = scmp.ge.s32.totalorder %s28, 2
      %s30 = scalar_select %p29, 0, %s28
      %s31 = ssub.s32 %s19, %s26
      %p32 = scmp.eq.s32.totalorder %s31, 0
      %s34 = sadd.s32 %s33, 1
      %s35 = scalar_select %p32, %s33, %s34
      %p38 = pneg %p32
      %p39 = scmp.eq.s32.totalorder %s11, 1
      %p40 = por %p38, %p39
      %p41 = scmp.ne.s32.totalorder %s33, %s36
      %p42 = scmp.eq.s32.totalorder %s11, 0
      %p43 = por %p41, %p42
      %p44 = scmp.ne.s32.totalorder %s33, %s36
      %p45 = scmp.eq.s32.totalorder %s16, 1
      %p46 = por %p44, %p45
      %p47 = scmp.ne.s32.totalorder %s36, %s37
      %p48 = scmp.eq.s32.totalorder %s16, 0
      %p49 = por %p47, %p48
      %p50 = scmp.ne.s32.totalorder %s36, %s37
      %p51 = scmp.eq.s32.totalorder %s17, 1
      %p52 = por %p50, %p51
      %p54 = scmp.ne.s32.totalorder %s37, %s53
      %p55 = scmp.eq.s32.totalorder %s17, 0
      %p56 = por %p54, %p55
      %s57 = smul.u32 %s19, %s18
      %s58 = smul.u32 %s26, %s30
      %s59 = ssub.s32 %s57, %s58
      %p60 = scmp.eq.s32.totalorder %s59, 0
      %s62 = sadd.s32 %s61, 1
      %s63 = scalar_select %p60, %s61, %s62
      %p66 = pneg %p60
      %p67 = scmp.eq.s32.totalorder %s11, 1
      %p68 = por %p66, %p67
      %p69 = scmp.ne.s32.totalorder %s61, %s64
      %p70 = scmp.eq.s32.totalorder %s11, 0
      %p71 = por %p69, %p70
      %p72 = scmp.ne.s32.totalorder %s61, %s64
      %p73 = scmp.eq.s32.totalorder %s16, 1
      %p74 = por %p72, %p73
      %p75 = scmp.ne.s32.totalorder %s64, %s65
      %p76 = scmp.eq.s32.totalorder %s16, 0
      %p77 = por %p75, %p76
      %p78 = scmp.ne.s32.totalorder %s64, %s65
      %p79 = scmp.eq.s32.totalorder %s17, 1
      %p80 = por %p78, %p79
      %p82 = scmp.ne.s32.totalorder %s65, %s81
      %p83 = scmp.eq.s32.totalorder %s17, 0
      %p84 = por %p82, %p83
      %p85 = scmp.le.s32.totalorder 1, %s11
      %p86 = scmp.lt.s32.totalorder %s11, 3
      %p87 = pnand %p85, %p86
      %p88 = pneg %p87
      // Predicated region
      $region9: #{tpu_custom_call.1} parent=5 // pred_check
        _
      $region10: #{tpu_custom_call.1} parent=5 // pred_check_branch
        %90 = sbr.rel (%p87) target = $region12
      $region11: #{tpu_custom_call.1} parent=5 // pred_region
        %s91 = ssub.s32 %s11, 1
        // Predicated region
        $region13: #{tpu_custom_call.1} parent=11 // pred_check
          %p92 = pneg %p49
        $region14: #{tpu_custom_call.1} parent=11 // pred_check_branch
          %94 = sbr.rel (%p92) target = $region16
        $region15: #{tpu_custom_call.1} parent=11 // pred_region
          %s95 = smul.u32 2, %s21
          %s97 = ssub.s32 256, 256
          %98 = vsyncadd [#allocation6], %s97
          %s99 = smul.addr %s95, 128
          %s100 = scalar_lea.hbm %s0, %s99
          %s101 = sshll.u32 [#allocation5], 4
          %s102 = int_to_ptr.vmem [resolvable:$true] %s101
          %107 = dma.hbm_to_vmem [thread:$0]  %s100, 256, %s102, [#allocation6], 128, 128, 8
        $region16: #{tpu_custom_call.1} parent=11 // pred_fallthru
          _
      $region12: #{tpu_custom_call.1} parent=5 // pred_fallthru
        _
      %p108 = scmp.lt.s32.totalorder %s11, 2
      // Predicated region
      $region17: #{tpu_custom_call.1} parent=5 // pred_check
        %p109 = pneg %p108
      $region18: #{tpu_custom_call.1} parent=5 // pred_check_branch
        %111 = sbr.rel (%p109) target = $region20
      $region19: #{tpu_custom_call.1} parent=5 // pred_region
        _
      $region20: #{tpu_custom_call.1} parent=5 // pred_fallthru
        _
      %p112 = scmp.le.s32.totalorder 1, %s11
      %p113 = scmp.lt.s32.totalorder %s11, 3
      %p114 = pnand %p112, %p113
      %p115 = pneg %p114
      // Predicated region
      $region21: #{tpu_custom_call.1} parent=5 // pred_check
        _
      $region22: #{tpu_custom_call.1} parent=5 // pred_check_branch
        %117 = sbr.rel (%p114) target = $region24
      $region23: #{tpu_custom_call.1} parent=5 // pred_region
        %s118 = ssub.s32 %s11, 1
        // Predicated region
        $region25: #{tpu_custom_call.1} parent=23 // pred_check
          %p119 = pneg %p49
        $region26: #{tpu_custom_call.1} parent=23 // pred_check_branch
          %121 = sbr.rel (%p119) target = $region28
        $region27: #{tpu_custom_call.1} parent=23 // pred_region
          %122 = dma.done [#allocation6], 256
        $region28: #{tpu_custom_call.1} parent=23 // pred_fallthru
          _
        %p123 = pneg %p49
        %p124 = pneg %p46
        %p125 = pneg %p77
        %p126 = pneg %p74
        %s127 = sand.u32 %s64, 1
        %s128 = scalar_lea.sflag [#allocation7], %s127
        %s129 = sand.u32 %s64, 1
        %s130 = smul.addr %s129, 16
        %s131 = scalar_lea.vmem [#allocation8], %s130
        %s132 = smul.u32 2, %s21
        %s133 = smul.u32 %s21, %s20
        %s134 = smul.u32 2, %s133
        %p135 = scmp.eq.s32.totalorder %s20, 0
        // Predicated region
        $region29: #{tpu_custom_call.1} parent=23 // pred_check
          %p136 = pneg %p135
        $region30: #{tpu_custom_call.1} parent=23 // pred_check_branch
          %138 = sbr.rel (%p136) target = $region32
        $region31: #{tpu_custom_call.1} parent=23 // pred_region
          %v139 = vld [vmem:[#allocation5] sm:$0xff]
          %v140 = vld [vmem:[#allocation5 + $0x8] sm:$0xff]
          %p141 = scmp.eq.s32.totalorder %s21, 0
          // Predicated region
          $region33: #{tpu_custom_call.1} parent=31 // pred_check
            %p142 = pneg %p141
          $region34: #{tpu_custom_call.1} parent=31 // pred_check_branch
            %144 = sbr.rel (%p142) target = $region36
          $region35: #{tpu_custom_call.1} parent=31 // pred_region
            %145 = vst [vmem:[#allocation2] sm:$0xff] inf
            %146 = vst [vmem:[#allocation3] sm:$0xff] -inf
          $region36: #{tpu_custom_call.1} parent=31 // pred_fallthru
            _
          %p147 = scmp.lt.s32.totalorder %s21, 0
          // Predicated region
          $region37: #{tpu_custom_call.1} parent=31 // pred_check
            %p148 = pneg %p147
          $region38: #{tpu_custom_call.1} parent=31 // pred_check_branch
            %150 = sbr.rel (%p148) target = $region40
          $region39: #{tpu_custom_call.1} parent=31 // pred_region
            %v151 = vmin.f32 %v139, %v140
            %v152 = vmax.f32 %v139, %v140
            %v153 = vld [vmem:[#allocation2] sm:$0xff]
            %v154 = vmin.f32 %v153, %v151
            %155 = vst [vmem:[#allocation2] sm:$0xff] %v154
            %v156 = vld [vmem:[#allocation3] sm:$0xff]
            %v157 = vmax.f32 %v156, %v152
            %158 = vst [vmem:[#allocation3] sm:$0xff] %v157
          $region40: #{tpu_custom_call.1} parent=31 // pred_fallthru
            _
          // Predicated region
          $region41: #{tpu_custom_call.1} parent=31 // pred_check
            %p159 = pneg %p141
          $region42: #{tpu_custom_call.1} parent=31 // pred_check_branch
            %161 = sbr.rel (%p159) target = $region44
          $region43: #{tpu_custom_call.1} parent=31 // pred_region
            %v162 = vlaneseq
            %v163 = vshrl.u32 %v162, 7
            %v164 = vadd.s32 %v163, 8
            %v165 = vlaneseq
            %v166 = vand.u32 %v165, 127
            %s167 = smul.u32 %s21, 16
            %v168 = vstv %s167
            %v169 = vadd.s32 %v168, %v163
            %v170 = vadd.s32 %v168, %v164
            %v171 = vmul.u32 %v169, 128
            %v172 = vmul.u32 %v170, 128
            %v173 = vadd.s32 %v171, %v166
            %v174 = vadd.s32 %v172, %v166
            %vm175 = vcmp.lt.s32.totalorder %v173, 2048
            %vm176 = vcmp.lt.s32.totalorder %v174, 2048
            %v177 = vsel %vm175, %v139, inf
            %v178 = vsel %vm176, %v140, inf
            %v179 = vsel %vm175, %v139, -inf
            %v180 = vsel %vm176, %v140, -inf
            %v181 = vmin.f32 %v177, %v178
            %v182 = vmax.f32 %v179, %v180
            %v183 = vld [vmem:[#allocation2] sm:$0xff]
            %v184 = vmin.f32 %v183, %v181
            %185 = vst [vmem:[#allocation2] sm:$0xff] %v184
            %v186 = vld [vmem:[#allocation3] sm:$0xff]
            %v187 = vmax.f32 %v186, %v182
            %188 = vst [vmem:[#allocation3] sm:$0xff] %v187
            %v189 = vld [vmem:[#allocation2] sm:$0xff]
            %190 = vmin.xlane.f32.xlu0 %v189
            %v191 = vpop.xlane.xlu0 %190
            %v192 = vrot.slane %v191, 4
            %v193 = vmin.f32 %v191, %v192
            %v194 = vrot.slane %v193, 2
            %v195 = vmin.f32 %v193, %v194
            %v196 = vrot.slane %v195, 1
            %v197 = vmin.f32 %v195, %v196
            %s198 = vtos %v197
            %v199 = vld [vmem:[#allocation3] sm:$0xff]
            %200 = vmax.xlane.f32.xlu0 %v199
            %v201 = vpop.xlane.xlu0 %200
            %v202 = vrot.slane %v201, 4
            %v203 = vmax.f32 %v201, %v202
            %v204 = vrot.slane %v203, 2
            %v205 = vmax.f32 %v203, %v204
            %v206 = vrot.slane %v205, 1
            %v207 = vmax.f32 %v205, %v206
            %s208 = vtos %v207
            %s209 = ssub.f32 %s208, %s198
            %p210 = scmp.ne.f32.partialorder %s209, 0.0
            %s211 = scalar_lea.smem [#allocation4], 0
            %212 = sst [smem:[%s211]] %s198
            %v213 = vrcp.pop 255.0
            %s214 = vtos %v213
            %s215 = smul.f32 %s209, %s214
            %s216 = scalar_select %p210, %s215, 1.0
            %s217 = scalar_lea.smem [#allocation4], 1
            %218 = sst [smem:[%s217]] %s216
            %v219 = vstv %s209
            %v220 = vrcp.pop %v219
            %s221 = vtos %v220
            %s222 = smul.f32 255.0, %s221
            %s223 = scalar_select %p210, %s222, 1.0
            %s224 = scalar_lea.smem [#allocation4], 2
            %225 = sst [smem:[%s224]] %s223
          $region44: #{tpu_custom_call.1} parent=31 // pred_fallthru
            _
        $region32: #{tpu_custom_call.1} parent=23 // pred_fallthru
          _
        %p226 = scmp.eq.s32.totalorder %s20, 1
        // Predicated region
        $region45: #{tpu_custom_call.1} parent=23 // pred_check
          %p227 = pneg %p226
        $region46: #{tpu_custom_call.1} parent=23 // pred_check_branch
          %229 = sbr.rel (%p227) target = $region48
        $region47: #{tpu_custom_call.1} parent=23 // pred_region
          %s230 = sld [smem:[#allocation4]]
          %s231 = sld [smem:[#allocation4 + $0x1]]
          %s232 = sld [smem:[#allocation4 + $0x2]]
          %v233 = vld [vmem:[#allocation5] sm:$0xff]
          %v234 = vld [vmem:[#allocation5 + $0x8] sm:$0xff]
          %v235 = vstv %s230
          %v236 = vsub.f32 %v233, %v235
          %v237 = vsub.f32 %v234, %v235
          %v238 = vstv %s232
          %v239 = vmul.f32 %v236, %v238
          %v240 = vmul.f32 %v237, %v238
          %v241 = vround.ne.pseudo %v239
          %v242 = vround.ne.pseudo %v240
          %v243 = vmax.f32 %v241, 0.0
          %v244 = vmax.f32 %v242, 0.0
          %v245 = vmin.f32 %v243, 255.0
          %v246 = vmin.f32 %v244, 255.0
          %v247 = vstv %s231
          %v248 = vmul.f32 %v245, %v247
          %v249 = vmul.f32 %v246, %v247
          %v250 = vadd.f32 %v248, %v235
          %v251 = vadd.f32 %v249, %v235
          %252 = vst [vmem:[%s131] sm:$0xff] %v250
          %253 = vst [vmem:[%s131 + $0x8] sm:$0xff] %v251
        $region48: #{tpu_custom_call.1} parent=23 // pred_fallthru
          _
        %s254 = sand.u32 %s64, 1
        %s255 = scalar_lea.sflag [#allocation7], %s254
        %s256 = sand.u32 %s64, 1
        %s257 = smul.addr %s256, 16
        %s258 = scalar_lea.vmem [#allocation8], %s257
        // Predicated region
        $region49: #{tpu_custom_call.1} parent=23 // pred_check
          %p259 = pneg %p74
        $region50: #{tpu_custom_call.1} parent=23 // pred_check_branch
          %261 = sbr.rel (%p259) target = $region52
        $region51: #{tpu_custom_call.1} parent=23 // pred_region
          %s262 = smul.u32 %s21, %s20
          %s263 = smul.u32 2, %s262
          %s265 = ssub.s32 256, 256
          %266 = vsyncadd %s255, %s265
          %s267 = smul.addr %s263, 128
          %s268 = scalar_lea.hbm %s1, %s267
          %s269 = sshll.u32 %s258, 4
          %s270 = int_to_ptr.vmem [resolvable:$true] %s269
          %275 = dma.vmem_to_hbm [thread:$0]  %s270, 256, %s268, %s255, 128, 128, 8
        $region52: #{tpu_custom_call.1} parent=23 // pred_fallthru
          _
      $region24: #{tpu_custom_call.1} parent=5 // pred_fallthru
        _
      %p276 = scmp.le.s32.totalorder 2, %s11
      // Predicated region
      $region53: #{tpu_custom_call.1} parent=5 // pred_check
        %p277 = pneg %p276
      $region54: #{tpu_custom_call.1} parent=5 // pred_check_branch
        %279 = sbr.rel (%p277) target = $region56
      $region55: #{tpu_custom_call.1} parent=5 // pred_region
        %s280 = ssub.s32 %s11, 2
        // Predicated region
        $region57: #{tpu_custom_call.1} parent=55 // pred_check
          %p281 = pneg %p80
        $region58: #{tpu_custom_call.1} parent=55 // pred_check_branch
          %283 = sbr.rel (%p281) target = $region60
        $region59: #{tpu_custom_call.1} parent=55 // pred_region
          %s284 = sand.u32 %s65, 1
          %s285 = scalar_lea.sflag [#allocation7], %s284
          %s286 = sand.u32 %s65, 1
          %s287 = smul.addr %s286, 16
          %s288 = scalar_lea.vmem [#allocation8], %s287
          %289 = dma.done %s285, 256
        $region60: #{tpu_custom_call.1} parent=55 // pred_fallthru
          _
      $region56: #{tpu_custom_call.1} parent=5 // pred_fallthru
        _
    $region6: #{tpu_custom_call.1} parent=1 // loop_footer
      %s15 = sadd.s32 1, %s11
    $region7: #{tpu_custom_call.1} parent=1 // loop_footer_branch
      %10 = sbr.rel target = $region3
    $region8: #{tpu_custom_call.1} parent=1 // loop_exit
      _
    %290 = vsyncpa [#allocation6], 1
    %s291 = scalar_lea.sflag [#allocation6], 1
    %292 = vsyncpa %s291, 1
    %293 = vsyncpa [#allocation7], 1
    %s294 = scalar_lea.sflag [#allocation7], 1
    %295 = vsyncpa %s294, 1

</llo_original>
